<compile_context>
chip_gen: v5e
topology: v5e:2x2
jax: 0.10.0
libtpu: 0.0.40
codegen_flags: <defaults>
</compile_context>

<pallas_src>
import functools

import jax
import jax.numpy as jnp
from jax.experimental import pallas as pl
from jax.experimental.pallas import tpu as pltpu

_SLOPE = 0.2  # LeakyReLU negative slope from the module.


def _leaky_relu(y):
    # slope in (0, 1): max(y, slope*y) == where(y >= 0, y, slope*y); vmul+vmax
    # is cheaper than cmp+mul+select on the VPU.
    return jnp.maximum(y, _SLOPE * y)


def _kernel_single_k(x_ref, a_ref, b_ref, o_ref, *, compute_dtype):
    # Whole K in one block: no accumulator scratch, no pl.when, single store.
    x = x_ref[...]
    a = a_ref[...]
    if compute_dtype is not None:
        x = x.astype(compute_dtype)
        a = a.astype(compute_dtype)
    y = jnp.dot(x, a, preferred_element_type=jnp.float32)
    y = y + b_ref[...].astype(jnp.float32)          # (1, tn) broadcasts over rows
    o_ref[...] = _leaky_relu(y).astype(o_ref.dtype)


def _kernel_multi_k(x_ref, a_ref, b_ref, o_ref, acc_ref, *, compute_dtype):
    # x_ref: (tm, tk), a_ref: (tk, tn), b_ref: (1, tn),
    # o_ref: (tm, tn), acc_ref: (tm, tn) f32 scratch (reduction over grid axis 2).
    k = pl.program_id(2)
    x = x_ref[...]
    a = a_ref[...]
    if compute_dtype is not None:
        x = x.astype(compute_dtype)
        a = a.astype(compute_dtype)
    partial = jnp.dot(x, a, preferred_element_type=jnp.float32)

    @pl.when(k == 0)
    def _():
        # Fold bias + first partial product into the init: avoids an extra full
        # (tm, tn) f32 accumulator read+write on the first K step.
        acc_ref[...] = partial + b_ref[...].astype(jnp.float32)

    @pl.when(k > 0)
    def _():
        acc_ref[...] += partial

    @pl.when(k == pl.num_programs(2) - 1)
    def _():
        acc = acc_ref[...]
        o_ref[...] = _leaky_relu(acc).astype(o_ref.dtype)


def _round_up(x, m):
    return (x + m - 1) // m * m


def _pick_tile(dim, candidates):
    """Largest candidate that evenly divides `dim`; fall back to full extent
    (a full-extent block always satisfies the (8, 128) tiling rule)."""
    for c in candidates:
        if dim >= c and dim % c == 0:
            return c
    return dim


def layer_forward(x, A, B, *, compute_dtype=None):
    """LeakyReLU_{0.2}(x @ A + B).

    x: (M, K) or (K,), A: (K, N), B: (N,).
    compute_dtype: optional dtype for the matmul inputs (e.g. jnp.bfloat16 for
    MXU-native throughput); cast happens *inside* the kernel, accumulation is
    always f32.
    """
    squeeze = (x.ndim == 1)
    if squeeze:
        x = x[None, :]
    M, K = x.shape
    K2, N = A.shape
    assert K == K2
    assert B.shape == (N,)

    out_dtype = x.dtype

    # --- Padding for hardware-friendly tiling (sliced off after the call). ---
    # N -> multiple of 128: guarantees unmasked, lane-dense output stores.
    # M, K -> multiples of 8: keeps sublane dims aligned; zero padding does not
    # change the matmul result (padded rows / zero K-columns are discarded).
    M_pad = max(_round_up(M, 8), 8)
    K_pad = max(_round_up(K, 8), 8)
    N_pad = _round_up(N, 128)
    if M_pad != M or K_pad != K:
        x = jnp.pad(x, ((0, M_pad - M), (0, K_pad - K)))
    if K_pad != K or N_pad != N:
        A = jnp.pad(A, ((0, K_pad - K), (0, N_pad - N)))
    if N_pad != N:
        B = jnp.pad(B, (0, N_pad - N))
    B2d = B.reshape(1, N_pad).astype(jnp.float32)

    # --- Tile selection. ---
    # Small-M regime is HBM-bound on streaming A: favour bigger A tiles.
    if M_pad <= 64:
        tn_cands = (1024, 512, 384, 256, 128)
        tk_cands = (1024, 512, 256, 128)
    else:
        tn_cands = (512, 384, 256, 128)
        tk_cands = (512, 256, 128)      # 256-aligned preferred (v6e/v7x MXU)
    tm = _pick_tile(M_pad, (512, 256, 128, 64, 32, 16, 8))
    tn = _pick_tile(N_pad, tn_cands)     # always a multiple of 128 (N_pad is)
    tk = _pick_tile(K_pad, tk_cands)

    # v7x has 2 TensorCores splitting "parallel" grid axes: if M is a single
    # block, keep >= 2 blocks along N (without losing lane density).
    if M_pad // tm == 1 and N_pad // tn < 2:
        for c in (256, 128):
            if N_pad % c == 0 and N_pad // c >= 2:
                tn = c
                break

    multi_k = (K_pad // tk) > 1

    if multi_k:
        grid = (M_pad // tm, N_pad // tn, K_pad // tk)
        kernel = functools.partial(_kernel_multi_k, compute_dtype=compute_dtype)
        in_specs = [
            pl.BlockSpec((tm, tk), lambda i, j, k: (i, k)),   # x tile
            pl.BlockSpec((tk, tn), lambda i, j, k: (k, j)),   # A tile
            pl.BlockSpec((1, tn), lambda i, j, k: (0, j)),    # bias tile
        ]
        out_specs = pl.BlockSpec((tm, tn), lambda i, j, k: (i, j))
        scratch_shapes = [pltpu.VMEM((tm, tn), jnp.float32)]
        dims = ("parallel", "parallel", "arbitrary")
    else:
        tk = K_pad
        grid = (M_pad // tm, N_pad // tn)
        kernel = functools.partial(_kernel_single_k, compute_dtype=compute_dtype)
        in_specs = [
            pl.BlockSpec((tm, K_pad), lambda i, j: (i, 0)),   # x tile (full K)
            pl.BlockSpec((K_pad, tn), lambda i, j: (0, j)),   # A tile (full K)
            pl.BlockSpec((1, tn), lambda i, j: (0, j)),       # bias tile
        ]
        out_specs = pl.BlockSpec((tm, tn), lambda i, j: (i, j))
        scratch_shapes = []
        dims = ("parallel", "parallel")

    # --- Cost estimate (advisory): count x/A refetch across output blocks. ---
    x_bytes = x.size * x.dtype.itemsize
    a_bytes = A.size * A.dtype.itemsize
    out_itemsize = jnp.dtype(out_dtype).itemsize
    bytes_accessed = (x_bytes * (N_pad // tn)
                      + a_bytes * (M_pad // tm)
                      + B2d.size * 4
                      + M_pad * N_pad * out_itemsize)
    cost = pl.CostEstimate(flops=2 * M_pad * K_pad * N_pad,
                           transcendentals=0,
                           bytes_accessed=bytes_accessed)

    # --- VMEM budget: double-buffered inputs/outputs + accumulator. ---
    in_itemsize = x.dtype.itemsize
    footprint = (2 * (tm * tk + tk * tn + tn) * in_itemsize
                 + 2 * tm * tn * out_itemsize
                 + (tm * tn * 4 if multi_k else 0))
    vmem_limit = None
    if footprint > (16 << 20):
        # Leave headroom; stay under v7x's 64 MiB physical VMEM.
        vmem_limit = min(footprint + (8 << 20), 64 << 20)

    out = pl.pallas_call(
        kernel,
        out_shape=jax.ShapeDtypeStruct((M_pad, N_pad), out_dtype),
        grid_spec=pltpu.PrefetchScalarGridSpec(
            num_scalar_prefetch=0,
            grid=grid,
            in_specs=in_specs,
            out_specs=out_specs,
            scratch_shapes=scratch_shapes,
        ),
        compiler_params=pltpu.CompilerParams(
            dimension_semantics=dims,
            vmem_limit_bytes=vmem_limit,
        ),
        cost_estimate=cost,
    )(x, A, B2d)

    if M_pad != M or N_pad != N:
        out = out[:M, :N]
    if squeeze:
        out = out[0]
    return out


def layer_reference(x, A, B, precision=jax.lax.Precision.HIGHEST):
    y = jnp.dot(x, A, precision=precision) + B
    return jnp.where(y >= 0, y, _SLOPE * y)


if __name__ == "__main__":
    # --- Case 1: small batched shapes consistent with the module
    #     (batch=8, input_size=32, output_size=128), f32, single-K fast path. ---
    M, K, N = 8, 32, 128
    kx, ka, kb = jax.random.split(jax.random.PRNGKey(0), 3)
    x = jax.random.normal(kx, (M, K), dtype=jnp.float32)
    A = jax.random.normal(ka, (K, N), dtype=jnp.float32)   # torch.randn(in, out)
    B = jax.random.normal(kb, (N,), dtype=jnp.float32)     # torch.randn(out)

    out = jax.block_until_ready(layer_forward(x, A, B))
    ref = layer_reference(x, A, B)
    assert out.shape == (M, N)
    assert jnp.allclose(out, ref, atol=1e-5, rtol=1e-5)

    # --- Case 2: literal module usage — 1-D x = randn(2), input_size=2. ---
    k1, k2, k3 = jax.random.split(jax.random.PRNGKey(1), 3)
    x1 = jax.random.normal(k1, (2,), dtype=jnp.float32)
    A1 = jax.random.normal(k2, (2, 128), dtype=jnp.float32)
    B1 = jax.random.normal(k3, (128,), dtype=jnp.float32)

    out1 = jax.block_until_ready(layer_forward(x1, A1, B1))
    ref1 = layer_reference(x1, A1, B1)
    assert out1.shape == (128,)
    assert jnp.allclose(out1, ref1, atol=1e-5, rtol=1e-5)

    # --- Case 3: multi-K accumulation + in-kernel bf16 cast + N-padding path
    #     (N=320 is not a multiple of 128; K=768 -> tk=256, 3 reduction steps). ---
    M2, K2, N2 = 64, 768, 320
    k4, k5, k6 = jax.random.split(jax.random.PRNGKey(2), 3)
    x2 = jax.random.normal(k4, (M2, K2), dtype=jnp.float32)
    A2 = jax.random.normal(k5, (K2, N2), dtype=jnp.float32)
    B2 = jax.random.normal(k6, (N2,), dtype=jnp.float32)

    out2 = jax.block_until_ready(
        layer_forward(x2, A2, B2, compute_dtype=jnp.bfloat16))
    ref2 = layer_reference(x2.astype(jnp.bfloat16).astype(jnp.float32),
                           A2.astype(jnp.bfloat16).astype(jnp.float32), B2)
    assert out2.shape == (M2, N2)
    assert jnp.allclose(out2, ref2, atol=1e-2, rtol=1e-2)

    print("KERNEL_OK")
</pallas_src>

<mosaic_0001>
module attributes {stable_mosaic.version = 11 : i64} {
  func.func @_kernel_single_k(%arg0: i32, %arg1: i32, %arg2: memref<8x32xf32, #tpu.memory_space<vmem>>, %arg3: memref<32x128xf32, #tpu.memory_space<vmem>>, %arg4: memref<1x128xf32, #tpu.memory_space<vmem>>, %arg5: memref<8x128xf32, #tpu.memory_space<vmem>>) attributes {dimension_semantics = [#tpu.dimension_semantics<parallel>, #tpu.dimension_semantics<parallel>], iteration_bounds = array<i64: 1, 1>, scalar_prefetch = 0 : i64, scratch_operands = 0 : i64, tpu.core_type = #tpu.core_type<tc>, window_params = [{transform_indices = @transform_0, window_bounds = array<i64: 8, 32>}, {transform_indices = @transform_1, window_bounds = array<i64: 32, 128>}, {transform_indices = @transform_2, window_bounds = array<i64: 1, 128>}, {transform_indices = @transform_3, window_bounds = array<i64: 8, 128>}]} {
    %c0 = arith.constant 0 : index
    %c0_0 = arith.constant 0 : index
    %0 = vector.load %arg2[%c0, %c0_0] : memref<8x32xf32, #tpu.memory_space<vmem>>, vector<8x32xf32>
    %c0_1 = arith.constant 0 : index
    %c0_2 = arith.constant 0 : index
    %1 = vector.load %arg3[%c0_1, %c0_2] : memref<32x128xf32, #tpu.memory_space<vmem>>, vector<32x128xf32>
    %cst = arith.constant dense<0.000000e+00> : vector<8x128xf32>
    %2 = tpu.matmul %0, %1, %cst {dimension_numbers = #tpu.dot_dimension_numbers<[1], [0], [0], [1], [0, 0, 1, 1], [], []>} : vector<8x32xf32>, vector<32x128xf32>, vector<8x128xf32> -> vector<8x128xf32>
    %c0_3 = arith.constant 0 : index
    %c0_4 = arith.constant 0 : index
    %3 = vector.load %arg4[%c0_3, %c0_4] : memref<1x128xf32, #tpu.memory_space<vmem>>, vector<1x128xf32>
    %4 = vector.broadcast %3 : vector<1x128xf32> to vector<8x128xf32>
    %5 = arith.addf %2, %4 : vector<8x128xf32>
    %cst_5 = arith.constant 2.000000e-01 : f32
    %6 = vector.broadcast %cst_5 : f32 to vector<8x128xf32>
    %7 = arith.mulf %6, %5 : vector<8x128xf32>
    %8 = arith.maximumf %5, %7 : vector<8x128xf32>
    %c0_6 = arith.constant 0 : index
    %c0_7 = arith.constant 0 : index
    %9 = vector.load %arg5[%c0_6, %c0_7] : memref<8x128xf32, #tpu.memory_space<vmem>>, vector<8x128xf32>
    tpu.vector_store %arg5[%c0_6, %c0_7], %8 {strides = array<i32>} : memref<8x128xf32, #tpu.memory_space<vmem>>, vector<8x128xf32>,
    return
  }
  func.func @transform_0(%arg0: i32, %arg1: i32) -> (i32, i32) {
    %c0_i32 = arith.constant 0 : i32
    %c0_i32_0 = arith.constant 0 : i32
    return %arg0, %c0_i32 : i32, i32
  }
  func.func @transform_1(%arg0: i32, %arg1: i32) -> (i32, i32) {
    %c0_i32 = arith.constant 0 : i32
    %c0_i32_0 = arith.constant 0 : i32
    return %c0_i32, %arg1 : i32, i32
  }
  func.func @transform_2(%arg0: i32, %arg1: i32) -> (i32, i32) {
    %c0_i32 = arith.constant 0 : i32
    %c0_i32_0 = arith.constant 0 : i32
    return %c0_i32, %arg1 : i32, i32
  }
  func.func @transform_3(%arg0: i32, %arg1: i32) -> (i32, i32) {
    %c0_i32 = arith.constant 0 : i32
    return %arg0, %arg1 : i32, i32
  }
}

</mosaic_0001>

<llo_original>
// kernel: tpu_custom_call.1
$region0: #{tpu_custom_call.1}
  #allocation0 [shape = 'u32[]', space=smem, size = 0x4, offset = 0x4, fixed_abs, tag = 'smem constant byte address 0x4 - core index']
  #allocation1 [shape = 'u32[72,128]{1,0:T(1,128)}', space=vmem, size = 0x9000, scoped, tag = 'internal scratch']
  %s0 = inlined_call_operand.hbm [shape: f32[8,32], index: 0, kind: input, shape index: {}]
  %s1 = inlined_call_operand.hbm [shape: f32[32,128], index: 1, kind: input, shape index: {}]
  %s2 = inlined_call_operand.vmem [shape: f32[1,128], index: 2, kind: input, shape index: {}]
  %s3 = inlined_call_operand.hbm [shape: f32[8,128], index: 3, kind: output, shape index: {}]
  %s4 = sld [smem:[#allocation0]]
  $region30: #{tpu_custom_call.1} parent=0
    _
  %s6 = ssub.s32 1, %s4
  %s7 = scalar_select 0, %s6, %s4
  $region1: #{tpu_custom_call.1} parent=0
    #allocation2 [shape = 'u8[4096]{0}', space=vmem, size = 0x1000, scoped, tag = 'input window, operand 0, single buffered']
    #allocation3 [shape = 's32[1]{0}', space=sflag, size = 0x4, scoped, tag = 'scoped memory for tpu_custom_call.1']
    #allocation4 [shape = 's32[1]{0}', space=sflag, size = 0x4, scoped, tag = 'scoped memory for tpu_custom_call.1']
    #allocation5 [shape = 'u8[16384]{0}', space=vmem, size = 0x4000, scoped, tag = 'input window, operand 1, single buffered']
    #allocation6 [shape = 's32[1]{0}', space=sflag, size = 0x4, scoped, tag = 'scoped memory for tpu_custom_call.1']
    #allocation7 [shape = 'u8[4096]{0}', space=vmem, size = 0x1000, scoped, tag = 'output window, operand 0, single buffered']
    %8 = vsyncpa [#allocation3], 0
    %9 = vsyncpa [#allocation6], 0
    %10 = vsyncpa [#allocation4], 0
    // Predicated region
    $region2: #{tpu_custom_call.1} parent=1 // pred_check
      _
    $region3: #{tpu_custom_call.1} parent=1 // pred_check_branch
      %12 = sbr.rel (0) target = $region5
    $region4: #{tpu_custom_call.1} parent=1 // pred_region
      %14 = vsyncadd [#allocation3], 0
      %s16 = sshll.u32 %s0, 4
      %s17 = int_to_ptr.hbm [resolvable:$true] %s16
      %s18 = sshll.u32 [#allocation2], 4
      %s19 = int_to_ptr.vmem [resolvable:$true] %s18
      %21 = dma.hbm_to_vmem [thread:$0]  %s17, 128, %s19, [#allocation3]
    $region5: #{tpu_custom_call.1} parent=1 // pred_fallthru
      _
    // Predicated region
    $region6: #{tpu_custom_call.1} parent=1 // pred_check
      _
    $region7: #{tpu_custom_call.1} parent=1 // pred_check_branch
      %23 = sbr.rel (0) target = $region9
    $region8: #{tpu_custom_call.1} parent=1 // pred_region
      %25 = vsyncadd [#allocation6], 0
      %s26 = sshll.u32 %s1, 4
      %s27 = int_to_ptr.hbm [resolvable:$true] %s26
      %s28 = sshll.u32 [#allocation5], 4
      %s29 = int_to_ptr.vmem [resolvable:$true] %s28
      %34 = dma.hbm_to_vmem [thread:$0]  %s27, 512, %s29, [#allocation6], 128, 128, 8
    $region9: #{tpu_custom_call.1} parent=1 // pred_fallthru
      _
    // Predicated region
    $region10: #{tpu_custom_call.1} parent=1 // pred_check
      _
    $region11: #{tpu_custom_call.1} parent=1 // pred_check_branch
      %36 = sbr.rel (0) target = $region13
    $region12: #{tpu_custom_call.1} parent=1 // pred_region
      _
    $region13: #{tpu_custom_call.1} parent=1 // pred_fallthru
      _
    // Predicated region
    $region14: #{tpu_custom_call.1} parent=1 // pred_check
      _
    $region15: #{tpu_custom_call.1} parent=1 // pred_check_branch
      %38 = sbr.rel (0) target = $region17
    $region16: #{tpu_custom_call.1} parent=1 // pred_region
      %40 = dma.done [#allocation3], 128
    $region17: #{tpu_custom_call.1} parent=1 // pred_fallthru
      _
    // Predicated region
    $region18: #{tpu_custom_call.1} parent=1 // pred_check
      _
    $region19: #{tpu_custom_call.1} parent=1 // pred_check_branch
      %42 = sbr.rel (0) target = $region21
    $region20: #{tpu_custom_call.1} parent=1 // pred_region
      %44 = dma.done [#allocation6], 512
    $region21: #{tpu_custom_call.1} parent=1 // pred_fallthru
      _
    %v45 = vld [vmem:[#allocation2] sm:$0xff]
    %v46 = vld [vmem:[#allocation5] sm:$0xff]
    %v47 = vld [vmem:[#allocation5 + $0x8] sm:$0xff]
    %v48 = vld [vmem:[#allocation5 + $0x10] sm:$0xff]
    %v49 = vld [vmem:[#allocation5 + $0x18] sm:$0xff]
    %v50 = vld [vmem:[%s2] sm:$0x1]
    %v52 = vperm.slane %v50, 0
    %vm54 = vcmask 261120
    %v56 = vsel %vm54, %v45, 0
    %58 = vmatpush.msra.mxu0 0.0
    %59 = vmatpush.msra.mxu0 0.0
    %60 = vmatpush.msra.mxu0 0.0
    %61 = vmatpush.msra.mxu0 0.0
    %62 = vmatpush.msra.mxu0 0.0
    %63 = vmatpush.msra.mxu0 0.0
    %64 = vmatpush.msra.mxu0 0.0
    %65 = vmatpush.msra.mxu0 0.0
    %66 = vmatpush.msra.mxu0 0.0
    %67 = vmatpush.msra.mxu0 0.0
    %68 = vmatpush.msra.mxu0 0.0
    %69 = vmatpush.msra.mxu0 0.0
    %70 = vmatpush.msra.mxu0 %v49
    %71 = vmatpush.msra.mxu0 %v48
    %72 = vmatpush.msra.mxu0 %v47
    %73 = vmatpush.msra.mxu0 %v46
    %74 = vmatmul.f32.gmra.mxu0 %v56
    %v75 = vpop.f32.mrf.mxu0
    %v76 = vadd.f32 %v52, %v75
    %77 = vdwg.mxu0
    %v78 = vmul.f32 %v76, 0.2
    %v79 = vmax.f32 %v76, %v78
    %80 = vst [vmem:[#allocation7] sm:$0xff] %v79
    // Predicated region
    $region22: #{tpu_custom_call.1} parent=1 // pred_check
      _
    $region23: #{tpu_custom_call.1} parent=1 // pred_check_branch
      %82 = sbr.rel (0) target = $region25
    $region24: #{tpu_custom_call.1} parent=1 // pred_region
      %84 = vsyncadd [#allocation4], 0
      %s86 = sshll.u32 [#allocation7], 4
      %s87 = int_to_ptr.vmem [resolvable:$true] %s86
      %s88 = sshll.u32 %s3, 4
      %s89 = int_to_ptr.hbm [resolvable:$true] %s88
      %91 = dma.vmem_to_hbm [thread:$0]  %s87, 128, %s89, [#allocation4]
    $region25: #{tpu_custom_call.1} parent=1 // pred_fallthru
      _
    // Predicated region
    $region26: #{tpu_custom_call.1} parent=1 // pred_check
      _
    $region27: #{tpu_custom_call.1} parent=1 // pred_check_branch
      %93 = sbr.rel (0) target = $region29
    $region28: #{tpu_custom_call.1} parent=1 // pred_region
      %95 = dma.done [#allocation4], 128
    $region29: #{tpu_custom_call.1} parent=1 // pred_fallthru
      _
    %96 = vsyncpa [#allocation3], 1
    %97 = vsyncpa [#allocation6], 1
    %98 = vsyncpa [#allocation4], 1

</llo_original>
